<compile_context>
chip_gen: v6e
topology: v6e:2x2x1
jax: 0.10.0
libtpu: 0.0.40
codegen_flags: <defaults>
</compile_context>

<pallas_src>
import functools

import jax
import jax.numpy as jnp
from jax.experimental import pallas as pl
from jax.experimental.pallas import tpu as pltpu


def _round_up(a, b):
    return ((a + b - 1) // b) * b


def _tpu_budget():
    """(max_dst_tile, max_src_tile, vmem_limit_bytes) per TPU generation."""
    try:
        kind = jax.devices()[0].device_kind.lower()
    except Exception:  # pragma: no cover - defensive
        kind = ""
    if "v5" in kind or "v6" in kind:
        # 128 MiB VMEM per core: larger tiles + raised scoped-VMEM limit.
        return 512, 512, 64 * 1024 * 1024
    # v7x (64 MiB per TC) or unknown generation: conservative tiles, default
    # scoped limit.  NOTE: on v7x prefer n_dst_tiles >= 2 so the "parallel"
    # axis shards across both TensorCores (irrelevant at tiny N).
    return 256, 256, None


# ----------------------------------------------------------------------------
# Kernel A: node projection.  xp = x @ W ; a_pad = xp @ [m_src | m_dst | 0...]
# Tiled over node rows ("parallel").  The logit output is padded to 128 lanes
# so the secondary store is lane-dense.
# ----------------------------------------------------------------------------
def _gat_project_kernel(x_ref, w_ref, m_ref, xp_ref, acat_ref):
    xp = jnp.dot(x_ref[...].astype(jnp.bfloat16), w_ref[...],
                 preferred_element_type=jnp.float32)              # [TM, H*C] f32
    acat_ref[...] = jnp.dot(xp.astype(jnp.bfloat16), m_ref[...],
                            preferred_element_type=jnp.float32)   # [TM, 128]
    xp_ref[...] = xp.astype(jnp.bfloat16)


# ----------------------------------------------------------------------------
# Kernel B: masked softmax attention + aggregation + bias + PReLU.
# Grid: (dst tiles "parallel", src tiles "arbitrary").  Online (flash-style)
# softmax with running per-head max / denom / weighted-sum scratch.
# ----------------------------------------------------------------------------
def _gat_attn_kernel(adst_ref, asrcT_ref, xp_ref, adj_ref, bias_ref, prelu_ref,
                     out_ref, m_ref, l_ref, acc_ref, *, heads, out_channels,
                     concat):
    j = pl.program_id(1)

    @pl.when(j == 0)
    def _():
        m_ref[...] = jnp.full_like(m_ref, -1e30)
        l_ref[...] = jnp.zeros_like(l_ref)
        acc_ref[...] = jnp.zeros_like(acc_ref)

    a_dst = adst_ref[...]                                   # [TM, hp] f32
    a_srcT = asrcT_ref[...]                                 # [hp, TS] f32 (hoisted T)
    mask = adj_ref[...].astype(jnp.float32) != 0.0          # [TM, TS] from int8
    neg = jnp.float32(-1e30)
    xp = xp_ref[...]                                        # [TS, H*C] bf16

    for h in range(heads):                                  # unrolled (H small)
        c0 = h * out_channels
        s = a_dst[:, h:h + 1] + a_srcT[h:h + 1, :]          # [TM, TS]
        s = jnp.maximum(s, 0.2 * s)                         # LeakyReLU(0.2)
        s = jnp.where(mask, s, neg)
        m_old = m_ref[:, h:h + 1]                           # [TM, 1]
        m_new = jnp.maximum(m_old, jnp.max(s, axis=1, keepdims=True))
        corr = jnp.exp(m_old - m_new)                       # [TM, 1]
        p = jnp.exp(s - m_new)                              # masked -> underflow to 0
        l_ref[:, h:h + 1] = corr * l_ref[:, h:h + 1] + jnp.sum(p, axis=1,
                                                               keepdims=True)
        acc_ref[:, c0:c0 + out_channels] = (
            corr * acc_ref[:, c0:c0 + out_channels]
            + jnp.dot(p.astype(jnp.bfloat16), xp[:, c0:c0 + out_channels],
                      preferred_element_type=jnp.float32))
        m_ref[:, h:h + 1] = m_new

    @pl.when(j == pl.num_programs(1) - 1)
    def _():
        # All-zero adjacency rows end up uniform (only padded rows; they are
        # sliced off by the wrapper and self-loops guarantee real rows are ok).
        inv_l = pl.reciprocal(jnp.maximum(l_ref[...], 1e-30), approx=True)
        acc = acc_ref[...]
        if concat:
            pieces = [acc[:, h * out_channels:(h + 1) * out_channels]
                      * inv_l[:, h:h + 1] for h in range(heads)]
            out = pieces[0] if heads == 1 else jnp.concatenate(pieces, axis=1)
        else:
            out = acc[:, 0:out_channels] * inv_l[:, 0:1]
            for h in range(1, heads):
                c0 = h * out_channels
                out = out + acc[:, c0:c0 + out_channels] * inv_l[:, h:h + 1]
            if heads > 1:
                out = out * (1.0 / heads)
        out = out + bias_ref[...]
        slope = prelu_ref[0]                                 # scalar from SMEM
        out_ref[...] = jnp.where(out > 0, out, slope * out)  # PReLU (single store)


def gat_layer(x, W, att_src, att_dst, bias, adj_i8, prelu_a, *, concat,
              tm, ts, vmem_limit):
    Np, Fin = x.shape
    H, C = att_src.shape
    HC = H * C
    out_dim = HC if concat else C
    hp = max(8, _round_up(H, 8))    # padded head axis (sublane-friendly)
    AP = 128                        # lane-dense width of the logit output
    assert 2 * hp <= AP

    # Block-diagonal mixers: (xp @ m_src)[:, h] == sum_c xp[:, h*C+c]*att_src[h,c]
    eye = jnp.zeros((H, hp), jnp.float32).at[jnp.arange(H), jnp.arange(H)].set(1.0)
    m_src = (att_src[:, :, None] * eye[:, None, :]).reshape(HC, hp)
    m_dst = (att_dst[:, :, None] * eye[:, None, :]).reshape(HC, hp)
    m_pad = jnp.zeros((HC, AP), jnp.float32)
    m_pad = m_pad.at[:, :hp].set(m_src).at[:, hp:2 * hp].set(m_dst)
    m_pad = m_pad.astype(jnp.bfloat16)
    W_bf16 = W.astype(jnp.bfloat16)

    n_dst = Np // tm
    n_src = Np // ts

    xp, acat = pl.pallas_call(
        _gat_project_kernel,
        out_shape=(jax.ShapeDtypeStruct((Np, HC), jnp.bfloat16),
                   jax.ShapeDtypeStruct((Np, AP), jnp.float32)),
        grid=(n_dst,),
        in_specs=[pl.BlockSpec((tm, Fin), lambda i: (i, 0)),
                  pl.BlockSpec((Fin, HC), lambda i: (0, 0)),
                  pl.BlockSpec((HC, AP), lambda i: (0, 0))],
        out_specs=(pl.BlockSpec((tm, HC), lambda i: (i, 0)),
                   pl.BlockSpec((tm, AP), lambda i: (i, 0))),
        compiler_params=pltpu.CompilerParams(
            dimension_semantics=("parallel",), vmem_limit_bytes=vmem_limit),
    )(x, W_bf16, m_pad)

    # Hoisted out of the attention kernel: grid-invariant transpose done once.
    a_srcT = jnp.transpose(acat[:, :hp])                    # [hp, Np]
    a_dst = acat[:, hp:2 * hp]                               # [Np, hp]

    attn_kernel = functools.partial(_gat_attn_kernel, heads=H,
                                    out_channels=C, concat=concat)
    out = pl.pallas_call(
        attn_kernel,
        out_shape=jax.ShapeDtypeStruct((Np, out_dim), jnp.float32),
        grid=(n_dst, n_src),
        in_specs=[
            pl.BlockSpec((tm, hp), lambda i, j: (i, 0)),     # a_dst (dst tile)
            pl.BlockSpec((hp, ts), lambda i, j: (0, j)),     # a_srcT (src tile)
            pl.BlockSpec((ts, HC), lambda i, j: (j, 0)),     # xp (src tile)
            pl.BlockSpec((tm, ts), lambda i, j: (i, j)),     # adjacency (int8)
            pl.BlockSpec((1, out_dim), lambda i, j: (0, 0)), # bias
            pl.BlockSpec(memory_space=pltpu.MemorySpace.SMEM),  # PReLU slope
        ],
        out_specs=pl.BlockSpec((tm, out_dim), lambda i, j: (i, 0)),
        scratch_shapes=[pltpu.VMEM((tm, hp), jnp.float32),   # running max  m
                        pltpu.VMEM((tm, hp), jnp.float32),   # running sum  l
                        pltpu.VMEM((tm, HC), jnp.float32)],  # running acc
        compiler_params=pltpu.CompilerParams(
            dimension_semantics=("parallel", "arbitrary"),
            vmem_limit_bytes=vmem_limit),
    )(a_dst, a_srcT, xp, adj_i8, bias.reshape(1, out_dim), prelu_a)
    return out


# ----------------------------------------------------------------------------
# Fused encoder BatchNorm1d(eval) + projection head (Linear + BN(eval) + PReLU).
# Projection-head BN is folded into the linear weight/bias on the host.
# ----------------------------------------------------------------------------
def _bn_proj_kernel(z_ref, s1_ref, b1_ref, w_ref, b2_ref, prelu_ref,
                    z_out_ref, p_out_ref):
    z = z_ref[...] * s1_ref[...] + b1_ref[...]              # encoder BN (eval)
    z_out_ref[...] = z
    y = jnp.dot(z.astype(jnp.bfloat16), w_ref[...],
                preferred_element_type=jnp.float32) + b2_ref[...]
    slope = prelu_ref[0]
    p_out_ref[...] = jnp.where(y > 0, y, slope * y)         # PReLU
    # Projection-head Dropout(p=0.2) is identity in eval mode.


def bn_and_projection(z, *, enc_bn, proj, eps=1e-5, tm=256, vmem_limit=None):
    Np, D = z.shape
    s1 = enc_bn["gamma"] / jnp.sqrt(enc_bn["running_var"] + eps)
    b1 = enc_bn["beta"] - enc_bn["running_mean"] * s1
    s2 = proj["gamma"] / jnp.sqrt(proj["running_var"] + eps)
    b2 = proj["beta"] - proj["running_mean"] * s2
    Wf = (proj["W"] * s2[None, :]).astype(jnp.bfloat16)     # fold proj BN
    bf = proj["b"] * s2 + b2

    zo, po = pl.pallas_call(
        _bn_proj_kernel,
        out_shape=(jax.ShapeDtypeStruct((Np, D), jnp.float32),
                   jax.ShapeDtypeStruct((Np, D), jnp.float32)),
        grid=(Np // tm,),
        in_specs=[pl.BlockSpec((tm, D), lambda i: (i, 0)),
                  pl.BlockSpec((1, D), lambda i: (0, 0)),
                  pl.BlockSpec((1, D), lambda i: (0, 0)),
                  pl.BlockSpec((D, D), lambda i: (0, 0)),
                  pl.BlockSpec((1, D), lambda i: (0, 0)),
                  pl.BlockSpec(memory_space=pltpu.MemorySpace.SMEM)],
        out_specs=(pl.BlockSpec((tm, D), lambda i: (i, 0)),
                   pl.BlockSpec((tm, D), lambda i: (i, 0))),
        compiler_params=pltpu.CompilerParams(
            dimension_semantics=("parallel",), vmem_limit_bytes=vmem_limit),
    )(z, s1.reshape(1, D), b1.reshape(1, D), Wf, bf.reshape(1, D),
      proj["prelu"])
    return zo, po


# ----------------------------------------------------------------------------
# Full GAT_Conv.forward (eval mode).
# ----------------------------------------------------------------------------
def gat_conv_forward(x, adj_i8, params):
    N = x.shape[0]
    max_dst, max_src, vmem_limit = _tpu_budget()

    # Pick tiles once; pad nodes / adjacency ONCE (not per layer).
    n8 = _round_up(N, 8)
    if n8 <= max_src:
        Np, ts = n8, n8                       # single source tile (== full dim)
    else:
        ts = max_src                          # multiple of 128 by construction
        Np = _round_up(N, ts)
    tm = min(max_dst, Np)
    while Np % tm:                            # tm must divide Np (multiple of 8)
        tm -= 8

    if Np != N:
        x = jnp.pad(x, ((0, Np - N), (0, 0)))
        adj_i8 = jnp.pad(adj_i8, ((0, Np - N), (0, Np - N)))

    z = x
    for lyr in params["layers"]:
        # conv -> PReLU fused in the attention kernel; F.dropout identity (eval).
        z = gat_layer(z, lyr["W"], lyr["att_src"], lyr["att_dst"], lyr["bias"],
                      adj_i8, params["prelu"], concat=lyr["concat"],
                      tm=tm, ts=ts, vmem_limit=vmem_limit)
    zo, po = bn_and_projection(z, enc_bn=params["encoder_bn"],
                               proj=params["proj"], tm=tm,
                               vmem_limit=vmem_limit)
    return zo[:N], po[:N]


def glorot(key, shape):
    lim = (6.0 / (shape[0] + shape[-1])) ** 0.5
    return jax.random.uniform(key, shape, jnp.float32, -lim, lim)


if __name__ == "__main__":
    key = jax.random.PRNGKey(0)
    N = 16            # number of graph nodes
    input_dim = 8
    hidden_dim = 32
    heads = 8
    num_layers = 3

    # Deterministic graph: two ring patterns (no duplicate edges, no self loops).
    src = jnp.concatenate([jnp.arange(N), jnp.arange(N)])
    dst = jnp.concatenate([(jnp.arange(N) + 1) % N, (jnp.arange(N) + 3) % N])
    edge_index = jnp.stack([src, dst]).astype(jnp.int32)          # [2, E]
    adj = jnp.zeros((N, N), jnp.int8).at[edge_index[1], edge_index[0]].set(1)
    adj = adj.at[jnp.arange(N), jnp.arange(N)].set(1)             # self loops

    # Layer configuration mirrors GAT_Conv.__init__ (middle/final heads=1).
    cfgs = [(input_dim, hidden_dim, heads, True)]
    for _ in range(1, num_layers - 1):
        cfgs.append((heads * hidden_dim, heads * hidden_dim, 1, True))
    cfgs.append((heads * hidden_dim, hidden_dim, 1, False))

    keys = iter(jax.random.split(key, 64))
    layers = []
    for fin, c, h, concat in cfgs:
        layers.append(dict(
            W=glorot(next(keys), (fin, h * c)),
            att_src=glorot(next(keys), (h, c)),
            att_dst=glorot(next(keys), (h, c)),
            bias=jnp.zeros((h * c if concat else c,), jnp.float32),
            concat=concat,
        ))

    params = dict(
        layers=layers,
        prelu=jnp.full((1,), 0.25, jnp.float32),                  # shared nn.PReLU()
        encoder_bn=dict(gamma=jnp.ones((hidden_dim,), jnp.float32),
                        beta=jnp.zeros((hidden_dim,), jnp.float32),
                        running_mean=jnp.zeros((hidden_dim,), jnp.float32),
                        running_var=jnp.ones((hidden_dim,), jnp.float32)),
        proj=dict(
            W=glorot(next(keys), (hidden_dim, hidden_dim)),
            b=jax.random.uniform(next(keys), (hidden_dim,), jnp.float32,
                                 -1.0 / hidden_dim ** 0.5, 1.0 / hidden_dim ** 0.5),
            gamma=jnp.ones((hidden_dim,), jnp.float32),
            beta=jnp.zeros((hidden_dim,), jnp.float32),
            running_mean=jnp.zeros((hidden_dim,), jnp.float32),
            running_var=jnp.ones((hidden_dim,), jnp.float32),
            prelu=jnp.full((1,), 0.25, jnp.float32),
        ),
    )

    x = jax.random.normal(next(keys), (N, input_dim), jnp.float32)

    z, proj_out = gat_conv_forward(x, adj, params)
    jax.block_until_ready((z, proj_out))
    assert z.shape == (N, hidden_dim) and proj_out.shape == (N, hidden_dim)
    assert bool(jnp.all(jnp.isfinite(z))) and bool(jnp.all(jnp.isfinite(proj_out)))
    print("KERNEL_OK")
</pallas_src>

<mosaic_0001>
module attributes {stable_mosaic.version = 11 : i64} {
  func.func @_gat_project_kernel(%arg0: i32, %arg1: memref<16x8xf32, #tpu.memory_space<vmem>>, %arg2: memref<8x256xbf16, #tpu.memory_space<vmem>>, %arg3: memref<256x128xbf16, #tpu.memory_space<vmem>>, %arg4: memref<16x256xbf16, #tpu.memory_space<vmem>>, %arg5: memref<16x128xf32, #tpu.memory_space<vmem>>) attributes {dimension_semantics = [#tpu.dimension_semantics<parallel>], iteration_bounds = array<i64: 1>, scalar_prefetch = 0 : i64, scratch_operands = 0 : i64, tpu.core_type = #tpu.core_type<tc>, window_params = [{transform_indices = @transform_0, window_bounds = array<i64: 16, 8>}, {pipeline_mode = #tpu.pipeline_mode<synchronous>, transform_indices = @transform_1, window_bounds = array<i64: 8, 256>}, {pipeline_mode = #tpu.pipeline_mode<synchronous>, transform_indices = @transform_2, window_bounds = array<i64: 256, 128>}, {transform_indices = @transform_3, window_bounds = array<i64: 16, 256>}, {transform_indices = @transform_4, window_bounds = array<i64: 16, 128>}]} {
    %c0 = arith.constant 0 : index
    %c0_0 = arith.constant 0 : index
    %0 = vector.load %arg1[%c0, %c0_0] : memref<16x8xf32, #tpu.memory_space<vmem>>, vector<16x8xf32>
    %1 = arith.truncf %0 : vector<16x8xf32> to vector<16x8xbf16>
    %c0_1 = arith.constant 0 : index
    %c0_2 = arith.constant 0 : index
    %2 = vector.load %arg2[%c0_1, %c0_2] : memref<8x256xbf16, #tpu.memory_space<vmem>>, vector<8x256xbf16>
    %cst = arith.constant dense<0.000000e+00> : vector<16x256xf32>
    %3 = tpu.matmul %1, %2, %cst {dimension_numbers = #tpu.dot_dimension_numbers<[1], [0], [0], [1], [0, 0, 1, 1], [], []>} : vector<16x8xbf16>, vector<8x256xbf16>, vector<16x256xf32> -> vector<16x256xf32>
    %4 = arith.truncf %3 : vector<16x256xf32> to vector<16x256xbf16>
    %c0_3 = arith.constant 0 : index
    %c0_4 = arith.constant 0 : index
    %5 = vector.load %arg3[%c0_3, %c0_4] : memref<256x128xbf16, #tpu.memory_space<vmem>>, vector<256x128xbf16>
    %cst_5 = arith.constant dense<0.000000e+00> : vector<16x128xf32>
    %6 = tpu.matmul %4, %5, %cst_5 {dimension_numbers = #tpu.dot_dimension_numbers<[1], [0], [0], [1], [0, 0, 1, 1], [], []>} : vector<16x256xbf16>, vector<256x128xbf16>, vector<16x128xf32> -> vector<16x128xf32>
    %c0_6 = arith.constant 0 : index
    %c0_7 = arith.constant 0 : index
    %7 = vector.load %arg5[%c0_6, %c0_7] : memref<16x128xf32, #tpu.memory_space<vmem>>, vector<16x128xf32>
    tpu.vector_store %arg5[%c0_6, %c0_7], %6 {strides = array<i32>} : memref<16x128xf32, #tpu.memory_space<vmem>>, vector<16x128xf32>,
    %8 = arith.truncf %3 : vector<16x256xf32> to vector<16x256xbf16>
    %c0_8 = arith.constant 0 : index
    %c0_9 = arith.constant 0 : index
    %9 = vector.load %arg4[%c0_8, %c0_9] : memref<16x256xbf16, #tpu.memory_space<vmem>>, vector<16x256xbf16>
    tpu.vector_store %arg4[%c0_8, %c0_9], %8 {strides = array<i32>} : memref<16x256xbf16, #tpu.memory_space<vmem>>, vector<16x256xbf16>,
    return
  }
  func.func @transform_0(%arg0: i32) -> (i32, i32) {
    %c0_i32 = arith.constant 0 : i32
    %c0_i32_0 = arith.constant 0 : i32
    return %arg0, %c0_i32 : i32, i32
  }
  func.func @transform_1(%arg0: i32) -> (i32, i32) {
    %c0_i32 = arith.constant 0 : i32
    %c0_i32_0 = arith.constant 0 : i32
    %c0_i32_1 = arith.constant 0 : i32
    return %c0_i32, %c0_i32_0 : i32, i32
  }
  func.func @transform_2(%arg0: i32) -> (i32, i32) {
    %c0_i32 = arith.constant 0 : i32
    %c0_i32_0 = arith.constant 0 : i32
    %c0_i32_1 = arith.constant 0 : i32
    return %c0_i32, %c0_i32_0 : i32, i32
  }
  func.func @transform_3(%arg0: i32) -> (i32, i32) {
    %c0_i32 = arith.constant 0 : i32
    %c0_i32_0 = arith.constant 0 : i32
    return %arg0, %c0_i32 : i32, i32
  }
  func.func @transform_4(%arg0: i32) -> (i32, i32) {
    %c0_i32 = arith.constant 0 : i32
    %c0_i32_0 = arith.constant 0 : i32
    return %arg0, %c0_i32 : i32, i32
  }
}

</mosaic_0001>

<llo_original>
// kernel: tpu_custom_call.1
$region0: #{tpu_custom_call.1}
  #allocation0 [shape = 'u32[]', space=smem, size = 0x4, offset = 0x4, fixed_abs, tag = 'smem constant byte address 0x4 - core index']
  #allocation1 [shape = 'u32[144,128]{1,0:T(1,128)}', space=vmem, size = 0x12000, scoped, tag = 'internal scratch']
  %s0 = inlined_call_operand.vmem [shape: f32[16,8], index: 0, kind: input, shape index: {}]
  %s1 = inlined_call_operand.vmem [shape: bf16[8,256], index: 1, kind: input, shape index: {}]
  %s2 = inlined_call_operand.hbm [shape: bf16[256,128], index: 2, kind: input, shape index: {}]
  %s3 = inlined_call_operand.hbm [shape: bf16[16,256], index: 3, kind: output, shape index: {0}]
  %s4 = inlined_call_operand.hbm [shape: f32[16,128], index: 4, kind: output, shape index: {1}]
  %5 = xla_tuple %s3, %s4
  %s6 = sld [smem:[#allocation0]]
  $region34: #{tpu_custom_call.1} parent=0
    _
  %s8 = ssub.s32 1, %s6
  %s9 = scalar_select 0, %s8, %s6
  $region1: #{tpu_custom_call.1} parent=0
    #allocation2 [shape = 'u8[65536]{0}', space=vmem, size = 0x10000, scoped, tag = 'input window, operand 2, single buffered']
    #allocation3 [shape = 's32[1]{0}', space=sflag, size = 0x4, scoped, tag = 'scoped memory for tpu_custom_call.1']
    #allocation4 [shape = 's32[1]{0}', space=sflag, size = 0x4, scoped, tag = 'scoped memory for tpu_custom_call.1']
    #allocation5 [shape = 'u8[8192]{0}', space=vmem, size = 0x2000, scoped, tag = 'output window, operand 0, single buffered']
    #allocation6 [shape = 'u8[8192]{0}', space=vmem, size = 0x2000, scoped, tag = 'output window, operand 1, single buffered']
    #allocation7 [shape = 's32[1]{0}', space=sflag, size = 0x4, scoped, tag = 'scoped memory for tpu_custom_call.1']
    %10 = vsyncpa [#allocation3], 0
    %11 = vsyncpa [#allocation4], 0
    %12 = vsyncpa [#allocation7], 0
    // Predicated region
    $region2: #{tpu_custom_call.1} parent=1 // pred_check
      _
    $region3: #{tpu_custom_call.1} parent=1 // pred_check_branch
      %14 = sbr.rel (0) target = $region5
    $region4: #{tpu_custom_call.1} parent=1 // pred_region
      _
    $region5: #{tpu_custom_call.1} parent=1 // pred_fallthru
      _
    // Predicated region
    $region6: #{tpu_custom_call.1} parent=1 // pred_check
      _
    $region7: #{tpu_custom_call.1} parent=1 // pred_check_branch
      %16 = sbr.rel (0) target = $region9
    $region8: #{tpu_custom_call.1} parent=1 // pred_region
      _
    $region9: #{tpu_custom_call.1} parent=1 // pred_fallthru
      _
    // Predicated region
    $region10: #{tpu_custom_call.1} parent=1 // pred_check
      _
    $region11: #{tpu_custom_call.1} parent=1 // pred_check_branch
      %18 = sbr.rel (0) target = $region13
    $region12: #{tpu_custom_call.1} parent=1 // pred_region
      %s20 = ssub.s32 2048, 2048
      %21 = vsyncadd [#allocation3], %s20
      %s22 = sshll.u32 [#allocation2], 4
      %s23 = int_to_ptr.vmem [resolvable:$true] %s22
      %28 = dma.hbm_to_vmem [thread:$0]  %s2, 2048, %s23, [#allocation3], 64, 64, 4
    $region13: #{tpu_custom_call.1} parent=1 // pred_fallthru
      _
    // Predicated region
    $region14: #{tpu_custom_call.1} parent=1 // pred_check
      _
    $region15: #{tpu_custom_call.1} parent=1 // pred_check_branch
      %30 = sbr.rel (0) target = $region17
    $region16: #{tpu_custom_call.1} parent=1 // pred_region
      %31 = dma.done [#allocation3], 2048
    $region17: #{tpu_custom_call.1} parent=1 // pred_fallthru
      _
    %v33 = vld [vmem:[%s0] sm:$0xff]
    %v34 = vld [vmem:[%s0 + $0x8] sm:$0xff]
    %v35 = vpack.c.bf16 %v34, %v33
    %v36 = vld [vmem:[%s1] sm:$0xff]
    %v38 = vunpack.c.l.b16 %v36
    %v39 = vunpack.c.h.b16 %v36
    %v40 = vpack.c.b16 %v38, %v38
    %v41 = vpack.c.b16 %v39, %v39
    %vm42 = vcmask 64512
    %v44 = vsel %vm42, %v35, 0
    %vm46 = vcmask 1043456
    %v48 = vsel %vm46, %v40, 0
    %v51 = vsel %vm46, %v41, 0
    %53 = vmatprep.subr.bf16.mxu0 0
    %54 = vmatpush1.bf16.msra.mxu0 0
    %55 = vmatprep.subr.bf16.mxu0 0
    %56 = vmatpush1.bf16.msra.mxu0 0
    %57 = vmatprep.subr.bf16.mxu0 0
    %58 = vmatpush1.bf16.msra.mxu0 0
    %59 = vmatprep.subr.bf16.mxu0 0
    %60 = vmatpush1.bf16.msra.mxu0 0
    %61 = vmatprep.subr.bf16.mxu0 0
    %62 = vmatpush1.bf16.msra.mxu0 0
    %63 = vmatprep.subr.bf16.mxu0 0
    %64 = vmatpush1.bf16.msra.mxu0 0
    %65 = vmatprep.subr.bf16.mxu0 0
    %66 = vmatpush1.bf16.msra.mxu0 0
    %67 = vmatprep.subr.bf16.mxu0 %v51
    %68 = vmatpush1.bf16.msra.mxu0 %v48
    %69 = vmatprep.subr.bf16.mxu0 0
    %70 = vmatpush2.bf16.msra.mxu0 0
    %71 = vmatprep.subr.bf16.mxu0 0
    %72 = vmatpush2.bf16.msra.mxu0 0
    %73 = vmatprep.subr.bf16.mxu0 0
    %74 = vmatpush2.bf16.msra.mxu0 0
    %75 = vmatprep.subr.bf16.mxu0 0
    %76 = vmatpush2.bf16.msra.mxu0 0
    %77 = vmatprep.subr.bf16.mxu0 0
    %78 = vmatpush2.bf16.msra.mxu0 0
    %79 = vmatprep.subr.bf16.mxu0 0
    %80 = vmatpush2.bf16.msra.mxu0 0
    %81 = vmatprep.subr.bf16.mxu0 0
    %82 = vmatpush2.bf16.msra.mxu0 0
    %83 = vmatprep.subr.bf16.mxu0 0
    %84 = vmatpush2.bf16.msra.mxu0 0
    %85 = vmatprep.mubr.bf16.mxu0 0
    %86 = vmatmul.mubr.bf16.gmra.mxu0 %v44
    %v87 = vpop.f32.mrf.mxu0
    %v88 = vadd.f32 0.0, %v87
    %v89 = vpop.f32.mrf.mxu0
    %v90 = vadd.f32 0.0, %v89
    %v91 = vpop.f32.mrf.mxu0
    %v92 = vadd.f32 0.0, %v91
    %v93 = vpop.f32.mrf.mxu0
    %v94 = vadd.f32 0.0, %v93
    %95 = vdwg.mxu0
    %v96 = vpack.c.bf16 %v92, %v88
    %v97 = vpack.c.bf16 %v94, %v90
    %v98 = vld [vmem:[#allocation2] sm:$0xf]
    %v99 = vld [vmem:[#allocation2 + $0x4] sm:$0xf]
    %v100 = vld [vmem:[#allocation2 + $0x8] sm:$0xf]
    %v101 = vld [vmem:[#allocation2 + $0xc] sm:$0xf]
    %v102 = vld [vmem:[#allocation2 + $0x10] sm:$0xf]
    %v103 = vld [vmem:[#allocation2 + $0x14] sm:$0xf]
    %v104 = vld [vmem:[#allocation2 + $0x18] sm:$0xf]
    %v105 = vld [vmem:[#allocation2 + $0x1c] sm:$0xf]
    %v106 = vld [vmem:[#allocation2 + $0x20] sm:$0xf]
    %v107 = vld [vmem:[#allocation2 + $0x24] sm:$0xf]
    %v108 = vld [vmem:[#allocation2 + $0x28] sm:$0xf]
    %v109 = vld [vmem:[#allocation2 + $0x2c] sm:$0xf]
    %v110 = vld [vmem:[#allocation2 + $0x30] sm:$0xf]
    %v111 = vld [vmem:[#allocation2 + $0x34] sm:$0xf]
    %v112 = vld [vmem:[#allocation2 + $0x38] sm:$0xf]
    %v113 = vld [vmem:[#allocation2 + $0x3c] sm:$0xf]
    %v114 = vld [vmem:[#allocation2 + $0x40] sm:$0xf]
    %v115 = vld [vmem:[#allocation2 + $0x44] sm:$0xf]
    %v116 = vld [vmem:[#allocation2 + $0x48] sm:$0xf]
    %v117 = vld [vmem:[#allocation2 + $0x4c] sm:$0xf]
    %v118 = vld [vmem:[#allocation2 + $0x50] sm:$0xf]
    %v119 = vld [vmem:[#allocation2 + $0x54] sm:$0xf]
    %v120 = vld [vmem:[#allocation2 + $0x58] sm:$0xf]
    %v121 = vld [vmem:[#allocation2 + $0x5c] sm:$0xf]
    %v122 = vld [vmem:[#allocation2 + $0x60] sm:$0xf]
    %v123 = vld [vmem:[#allocation2 + $0x64] sm:$0xf]
    %v124 = vld [vmem:[#allocation2 + $0x68] sm:$0xf]
    %v125 = vld [vmem:[#allocation2 + $0x6c] sm:$0xf]
    %v126 = vld [vmem:[#allocation2 + $0x70] sm:$0xf]
    %v127 = vld [vmem:[#allocation2 + $0x74] sm:$0xf]
    %v128 = vld [vmem:[#allocation2 + $0x78] sm:$0xf]
    %v129 = vld [vmem:[#allocation2 + $0x7c] sm:$0xf]
    %v162 = vunpack.c.l.b16 %v98
    %v163 = vunpack.c.l.b16 %v99
    %v164 = vunpack.c.l.b16 %v100
    %v165 = vunpack.c.l.b16 %v101
    %v166 = vunpack.c.l.b16 %v102
    %v167 = vunpack.c.l.b16 %v103
    %v168 = vunpack.c.l.b16 %v104
    %v169 = vunpack.c.l.b16 %v105
    %v170 = vunpack.c.l.b16 %v106
    %v171 = vunpack.c.l.b16 %v107
    %v172 = vunpack.c.l.b16 %v108
    %v173 = vunpack.c.l.b16 %v109
    %v174 = vunpack.c.l.b16 %v110
    %v175 = vunpack.c.l.b16 %v111
    %v176 = vunpack.c.l.b16 %v112
    %v177 = vunpack.c.l.b16 %v113
    %v178 = vunpack.c.l.b16 %v114
    %v179 = vunpack.c.l.b16 %v115
    %v180 = vunpack.c.l.b16 %v116
    %v181 = vunpack.c.l.b16 %v117
    %v182 = vunpack.c.l.b16 %v118
    %v183 = vunpack.c.l.b16 %v119
    %v184 = vunpack.c.l.b16 %v120
    %v185 = vunpack.c.l.b16 %v121
    %v186 = vunpack.c.l.b16 %v122
    %v187 = vunpack.c.l.b16 %v123
    %v188 = vunpack.c.l.b16 %v124
    %v189 = vunpack.c.l.b16 %v125
    %v190 = vunpack.c.l.b16 %v126
    %v191 = vunpack.c.l.b16 %v127
    %v192 = vunpack.c.l.b16 %v128
    %v193 = vunpack.c.l.b16 %v129
    %v194 = vpack.c.b16 %v163, %v162
    %v195 = vpack.c.b16 %v165, %v164
    %v196 = vpack.c.b16 %v167, %v166
    %v197 = vpack.c.b16 %v169, %v168
    %v198 = vpack.c.b16 %v171, %v170
    %v199 = vpack.c.b16 %v173, %v172
    %v200 = vpack.c.b16 %v175, %v174
    %v201 = vpack.c.b16 %v177, %v176
    %v202 = vpack.c.b16 %v179, %v178
    %v203 = vpack.c.b16 %v181, %v180
    %v204 = vpack.c.b16 %v183, %v182
    %v205 = vpack.c.b16 %v185, %v184
    %v206 = vpack.c.b16 %v187, %v186
    %v207 = vpack.c.b16 %v189, %v188
    %v208 = vpack.c.b16 %v191, %v190
    %v209 = vpack.c.b16 %v193, %v192
    %226 = vmatprep.subr.bf16.mxu0 0
    %227 = vmatpush1.bf16.msra.mxu0 %v201
    %228 = vmatprep.subr.bf16.mxu0 0
    %229 = vmatpush1.bf16.msra.mxu0 %v200
    %230 = vmatprep.subr.bf16.mxu0 0
    %231 = vmatpush1.bf16.msra.mxu0 %v199
    %232 = vmatprep.subr.bf16.mxu0 0
    %233 = vmatpush1.bf16.msra.mxu0 %v198
    %234 = vmatprep.subr.bf16.mxu0 0
    %235 = vmatpush1.bf16.msra.mxu0 %v197
    %236 = vmatprep.subr.bf16.mxu0 0
    %237 = vmatpush1.bf16.msra.mxu0 %v196
    %238 = vmatprep.subr.bf16.mxu0 0
    %239 = vmatpush1.bf16.msra.mxu0 %v195
    %240 = vmatprep.subr.bf16.mxu0 0
    %241 = vmatpush1.bf16.msra.mxu0 %v194
    %242 = vmatprep.subr.bf16.mxu0 0
    %243 = vmatpush2.bf16.msra.mxu0 %v209
    %244 = vmatprep.subr.bf16.mxu0 0
    %245 = vmatpush2.bf16.msra.mxu0 %v208
    %246 = vmatprep.subr.bf16.mxu0 0
    %247 = vmatpush2.bf16.msra.mxu0 %v207
    %248 = vmatprep.subr.bf16.mxu0 0
    %249 = vmatpush2.bf16.msra.mxu0 %v206
    %250 = vmatprep.subr.bf16.mxu0 0
    %251 = vmatpush2.bf16.msra.mxu0 %v205
    %252 = vmatprep.subr.bf16.mxu0 0
    %253 = vmatpush2.bf16.msra.mxu0 %v204
    %254 = vmatprep.subr.bf16.mxu0 0
    %255 = vmatpush2.bf16.msra.mxu0 %v203
    %256 = vmatprep.subr.bf16.mxu0 0
    %257 = vmatpush2.bf16.msra.mxu0 %v202
    %258 = vmatprep.mubr.bf16.mxu0 %v97
    %259 = vmatmul.mubr.bf16.gmra.mxu0 %v96
    %v260 = vpop.f32.mrf.mxu0
    %v261 = vadd.f32 0.0, %v260
    %v262 = vpop.f32.mrf.mxu0
    %v263 = vpop.f32.mrf.mxu0
    %v264 = vadd.f32 0.0, %v263
    %v265 = vpop.f32.mrf.mxu0
    %266 = vdwg.mxu0
    %267 = vst [vmem:[#allocation6] sm:$0xff] %v261
    %268 = vst [vmem:[#allocation6 + $0x8] sm:$0xff] %v264
    %v271 = vunpack.c.l.b16 %v96
    %v272 = vunpack.c.l.b16 %v97
    %v273 = vunpack.c.h.b16 %v96
    %v274 = vunpack.c.h.b16 %v97
    %v275 = vpack.c.b16 %v272, %v271
    %v276 = vpack.c.b16 %v274, %v273
    %279 = vst [vmem:[#allocation5] sm:$0xff] %v275
    %280 = vst [vmem:[#allocation5 + $0x8] sm:$0xff] %v276
    // Predicated region
    $region18: #{tpu_custom_call.1} parent=1 // pred_check
      _
    $region19: #{tpu_custom_call.1} parent=1 // pred_check_branch
      %282 = sbr.rel (0) target = $region21
    $region20: #{tpu_custom_call.1} parent=1 // pred_region
      %s284 = ssub.s32 256, 256
      %285 = vsyncadd [#allocation4], %s284
      %s286 = sshll.u32 [#allocation5], 4
      %s287 = int_to_ptr.vmem [resolvable:$true] %s286
      %292 = dma.vmem_to_hbm [thread:$0]  %s287, 256, %s3, [#allocation4], 128, 128, 8
    $region21: #{tpu_custom_call.1} parent=1 // pred_fallthru
      _
    // Predicated region
    $region22: #{tpu_custom_call.1} parent=1 // pred_check
      _
    $region23: #{tpu_custom_call.1} parent=1 // pred_check_branch
      %294 = sbr.rel (0) target = $region25
    $region24: #{tpu_custom_call.1} parent=1 // pred_region
      %s296 = ssub.s32 256, 256
      %297 = vsyncadd [#allocation7], %s296
      %s298 = sshll.u32 [#allocation6], 4
      %s299 = int_to_ptr.vmem [resolvable:$true] %s298
      %304 = dma.vmem_to_hbm [thread:$0]  %s299, 256, %s4, [#allocation7], 128, 128, 8
    $region25: #{tpu_custom_call.1} parent=1 // pred_fallthru
      _
    // Predicated region
    $region26: #{tpu_custom_call.1} parent=1 // pred_check
      _
    $region27: #{tpu_custom_call.1} parent=1 // pred_check_branch
      %306 = sbr.rel (0) target = $region29
    $region28: #{tpu_custom_call.1} parent=1 // pred_region
      %307 = dma.done [#allocation4], 256
    $region29: #{tpu_custom_call.1} parent=1 // pred_fallthru
      _
    // Predicated region
    $region30: #{tpu_custom_call.1} parent=1 // pred_check
      _
    $region31: #{tpu_custom_call.1} parent=1 // pred_check_branch
      %309 = sbr.rel (0) target = $region33
    $region32: #{tpu_custom_call.1} parent=1 // pred_region
      %310 = dma.done [#allocation7], 256
    $region33: #{tpu_custom_call.1} parent=1 // pred_fallthru
      _
    %311 = vsyncpa [#allocation3], 1
    %312 = vsyncpa [#allocation4], 1
    %313 = vsyncpa [#allocation7], 1

</llo_original>
